<compile_context>
chip_gen: v5e
topology: v5e:2x2
jax: 0.10.0
libtpu: 0.0.40
codegen_flags: <defaults>
</compile_context>

<pallas_src>
import jax
import jax.numpy as jnp
from jax.experimental import pallas as pl
from jax.experimental.pallas import tpu as pltpu  # noqa: F401  (kept for TPU-specific tuning hooks)

# ---- hyperparameters implied by the module's __init__ (small synthetic sizes) ----
SHARED_IMGNET_DIMS = [32, 64, 32]     # opt['shared_imgnet_dims']
SEPARATED_IMGNET_DIMS = [32, 32, 16]  # opt['separated_imgnet_dims']
SHARED_REPR_DIMS = [32, 32, 5]        # opt['shared_reprnet_dims'] (2*16 concat -> 5 outputs)

BATCH = 16
LANES = 128          # one MXU/vreg lane tile on all generations (keep at 128 for v5e)
NUM_FUSED_LAYERS = 6  # 2 shared + 2 separated (block-diag) + 2 repr


def apnet_kernel(x_ref, w_ref, b_ref, out_ref):
    """x_ref: (B, 128) packed [img1 | img2 | 0]; w_ref: (6*128, 128); b_ref: (8, 128)."""
    a = x_ref[...]
    for l in range(NUM_FUSED_LAYERS):
        w = w_ref[pl.ds(l * LANES, LANES), :]          # static slice: free view
        b = b_ref[pl.ds(l, 1), :]                      # (1, 128), broadcast over batch
        a = jnp.dot(a, w, preferred_element_type=jnp.float32) + b
        if l != NUM_FUSED_LAYERS - 1:                  # no ReLU on the last repr layer
            a = jnp.maximum(a, 0.0)
    out_ref[...] = a.astype(out_ref.dtype)             # lane-dense (B, 128) store


def init_params(key):
    """Deterministic synthetic parameters. Weights stored as (in, out); biases (out,)."""
    params = {}

    def make_layer(k, d_in, d_out, name):
        kw, kb = jax.random.split(k)
        params[name + "_w"] = (
            jax.random.normal(kw, (d_in, d_out), jnp.float32) * (1.0 / jnp.sqrt(d_in))
        )
        params[name + "_b"] = jax.random.normal(kb, (d_out,), jnp.float32) * 0.01

    keys = jax.random.split(key, 8)
    make_layer(keys[0], SHARED_IMGNET_DIMS[0], SHARED_IMGNET_DIMS[1], "s0")
    make_layer(keys[1], SHARED_IMGNET_DIMS[1], SHARED_IMGNET_DIMS[2], "s1")
    make_layer(keys[2], SEPARATED_IMGNET_DIMS[0], SEPARATED_IMGNET_DIMS[1], "i0")
    make_layer(keys[3], SEPARATED_IMGNET_DIMS[1], SEPARATED_IMGNET_DIMS[2], "i1")
    make_layer(keys[4], SEPARATED_IMGNET_DIMS[0], SEPARATED_IMGNET_DIMS[1], "o0")
    make_layer(keys[5], SEPARATED_IMGNET_DIMS[1], SEPARATED_IMGNET_DIMS[2], "o1")
    make_layer(keys[6], SHARED_REPR_DIMS[0], SHARED_REPR_DIMS[1], "r0")
    make_layer(keys[7], SHARED_REPR_DIMS[1], SHARED_REPR_DIMS[2], "r1")
    return params


def pack_params(params):
    """Pack all layers into one 128-lane-padded weight slab and one bias slab.

    Fused-layer lane layout (activations are (B, 128)):
      L0 shared s0  : in  [img1 0:32 | img2 32:64]      -> out [h1a 0:64  | h2a 64:128]
      L1 shared s1  : in  [h1a 0:64  | h2a 64:128]      -> out [h1  0:32  | h2  32:64 ]
      L2 sep   0    : in  [h1  0:32  | h2  32:64 ]      -> out [p1  0:32  | p2  32:64 ]  (iw0 / ow0)
      L3 sep   1    : in  [p1  0:32  | p2  32:64 ]      -> out [r1  0:16  | r2  16:32 ]  (iw1 / ow1)
                      => lanes 0:32 are exactly concat([r1, r2])  (concat is free)
      L4 repr  0    : in  [cat 0:32]                    -> out [c0  0:32]
      L5 repr  1    : in  [c0  0:32]                    -> out [out 0:5 ]  (no ReLU)
    """
    D = LANES
    w_slab = jnp.zeros((NUM_FUSED_LAYERS * D, D), jnp.float32)
    b_slab = jnp.zeros((8, D), jnp.float32)  # 8 rows = one f32 vreg of sublanes

    def put_w(slab, layer, r0, c0, w):
        return slab.at[layer * D + r0: layer * D + r0 + w.shape[0],
                       c0: c0 + w.shape[1]].set(w)

    def put_b(slab, layer, c0, b):
        return slab.at[layer, c0: c0 + b.shape[0]].set(b)

    # L0: shared layer 0, block-diagonal (applied to both images)
    w_slab = put_w(w_slab, 0, 0, 0, params["s0_w"])
    w_slab = put_w(w_slab, 0, 32, 64, params["s0_w"])
    b_slab = put_b(b_slab, 0, 0, params["s0_b"])
    b_slab = put_b(b_slab, 0, 64, params["s0_b"])
    # L1: shared layer 1, block-diagonal
    w_slab = put_w(w_slab, 1, 0, 0, params["s1_w"])
    w_slab = put_w(w_slab, 1, 64, 32, params["s1_w"])
    b_slab = put_b(b_slab, 1, 0, params["s1_b"])
    b_slab = put_b(b_slab, 1, 32, params["s1_b"])
    # L2: separated layer 0 (input_net on path 1, output_net on path 2)
    w_slab = put_w(w_slab, 2, 0, 0, params["i0_w"])
    w_slab = put_w(w_slab, 2, 32, 32, params["o0_w"])
    b_slab = put_b(b_slab, 2, 0, params["i0_b"])
    b_slab = put_b(b_slab, 2, 32, params["o0_b"])
    # L3: separated layer 1 -> output lanes 0:32 are concat([r1, r2])
    w_slab = put_w(w_slab, 3, 0, 0, params["i1_w"])
    w_slab = put_w(w_slab, 3, 32, 16, params["o1_w"])
    b_slab = put_b(b_slab, 3, 0, params["i1_b"])
    b_slab = put_b(b_slab, 3, 16, params["o1_b"])
    # L4: repr layer 0
    w_slab = put_w(w_slab, 4, 0, 0, params["r0_w"])
    b_slab = put_b(b_slab, 4, 0, params["r0_b"])
    # L5: repr layer 1 (no ReLU)
    w_slab = put_w(w_slab, 5, 0, 0, params["r1_w"])
    b_slab = put_b(b_slab, 5, 0, params["r1_b"])
    return w_slab, b_slab


def apnet_forward(img1, img2, params):
    B, d_in = img1.shape
    d_out = SHARED_REPR_DIMS[-1]

    w_slab, b_slab = pack_params(params)

    # Pack the two images side by side in one lane-dense (B, 128) tile.
    x = jnp.zeros((B, LANES), jnp.float32)
    x = x.at[:, 0:d_in].set(img1)
    x = x.at[:, d_in:2 * d_in].set(img2)

    # No grid: whole problem in one invocation, whole arrays in VMEM (3 input DMAs,
    # 1 lane-dense output DMA).
    out_padded = pl.pallas_call(
        apnet_kernel,
        out_shape=jax.ShapeDtypeStruct((B, LANES), jnp.float32),
    )(x, w_slab, b_slab)

    return out_padded[:, :d_out]


def apnet_reference(img1, img2, params):
    """Pure-JAX reference matching the PyTorch forward."""
    relu = lambda v: jnp.maximum(v, 0.0)

    def lin(x, name):
        return x @ params[name + "_w"] + params[name + "_b"]

    h1 = relu(lin(relu(lin(img1, "s0")), "s1"))
    h2 = relu(lin(relu(lin(img2, "s0")), "s1"))
    r1 = relu(lin(relu(lin(h1, "i0")), "i1"))
    r2 = relu(lin(relu(lin(h2, "o0")), "o1"))
    c = jnp.concatenate([r1, r2], axis=-1)
    return lin(relu(lin(c, "r0")), "r1")  # no ReLU on the last layer


if __name__ == "__main__":
    key = jax.random.PRNGKey(0)
    k_img1, k_img2, k_params = jax.random.split(key, 3)

    img1 = jax.random.normal(k_img1, (BATCH, SHARED_IMGNET_DIMS[0]), jnp.float32)
    img2 = jax.random.normal(k_img2, (BATCH, SHARED_IMGNET_DIMS[0]), jnp.float32)
    params = init_params(k_params)

    out = apnet_forward(img1, img2, params)
    out = jax.block_until_ready(out)

    ref = apnet_reference(img1, img2, params)
    assert out.shape == (BATCH, SHARED_REPR_DIMS[-1])
    assert jnp.allclose(out, ref, atol=1e-4, rtol=1e-5), "mismatch vs reference"

    print("KERNEL_OK")
</pallas_src>

<mosaic_0001>
module attributes {stable_mosaic.version = 11 : i64} {
  func.func @apnet_kernel(%arg0: memref<16x128xf32, #tpu.memory_space<vmem>>, %arg1: memref<768x128xf32, #tpu.memory_space<vmem>>, %arg2: memref<8x128xf32, #tpu.memory_space<vmem>>, %arg3: memref<16x128xf32, #tpu.memory_space<vmem>>) attributes {dimension_semantics = [], scalar_prefetch = 0 : i64, scratch_operands = 0 : i64, tpu.core_type = #tpu.core_type<tc>} {
    %c0 = arith.constant 0 : index
    %c0_0 = arith.constant 0 : index
    %0 = vector.load %arg0[%c0, %c0_0] : memref<16x128xf32, #tpu.memory_space<vmem>>, vector<16x128xf32>
    %c0_1 = arith.constant 0 : index
    %c0_2 = arith.constant 0 : index
    %1 = vector.load %arg1[%c0_1, %c0_2] : memref<768x128xf32, #tpu.memory_space<vmem>>, vector<128x128xf32>
    %c0_3 = arith.constant 0 : index
    %c0_4 = arith.constant 0 : index
    %2 = vector.load %arg2[%c0_3, %c0_4] : memref<8x128xf32, #tpu.memory_space<vmem>>, vector<1x128xf32>
    %cst = arith.constant dense<0.000000e+00> : vector<16x128xf32>
    %3 = tpu.matmul %0, %1, %cst {dimension_numbers = #tpu.dot_dimension_numbers<[1], [0], [0], [1], [0, 0, 1, 1], [], []>} : vector<16x128xf32>, vector<128x128xf32>, vector<16x128xf32> -> vector<16x128xf32>
    %4 = vector.broadcast %2 : vector<1x128xf32> to vector<16x128xf32>
    %5 = arith.addf %3, %4 : vector<16x128xf32>
    %cst_5 = arith.constant 0.000000e+00 : f32
    %6 = vector.broadcast %cst_5 : f32 to vector<16x128xf32>
    %7 = arith.maximumf %5, %6 : vector<16x128xf32>
    %c128 = arith.constant 128 : index
    %c0_6 = arith.constant 0 : index
    %8 = vector.load %arg1[%c128, %c0_6] : memref<768x128xf32, #tpu.memory_space<vmem>>, vector<128x128xf32>
    %c1 = arith.constant 1 : index
    %c0_7 = arith.constant 0 : index
    %9 = vector.load %arg2[%c1, %c0_7] : memref<8x128xf32, #tpu.memory_space<vmem>>, vector<1x128xf32>
    %cst_8 = arith.constant dense<0.000000e+00> : vector<16x128xf32>
    %10 = tpu.matmul %7, %8, %cst_8 {dimension_numbers = #tpu.dot_dimension_numbers<[1], [0], [0], [1], [0, 0, 1, 1], [], []>} : vector<16x128xf32>, vector<128x128xf32>, vector<16x128xf32> -> vector<16x128xf32>
    %11 = vector.broadcast %9 : vector<1x128xf32> to vector<16x128xf32>
    %12 = arith.addf %10, %11 : vector<16x128xf32>
    %cst_9 = arith.constant 0.000000e+00 : f32
    %13 = vector.broadcast %cst_9 : f32 to vector<16x128xf32>
    %14 = arith.maximumf %12, %13 : vector<16x128xf32>
    %c256 = arith.constant 256 : index
    %c0_10 = arith.constant 0 : index
    %15 = vector.load %arg1[%c256, %c0_10] : memref<768x128xf32, #tpu.memory_space<vmem>>, vector<128x128xf32>
    %c2 = arith.constant 2 : index
    %c0_11 = arith.constant 0 : index
    %16 = vector.load %arg2[%c2, %c0_11] : memref<8x128xf32, #tpu.memory_space<vmem>>, vector<1x128xf32>
    %cst_12 = arith.constant dense<0.000000e+00> : vector<16x128xf32>
    %17 = tpu.matmul %14, %15, %cst_12 {dimension_numbers = #tpu.dot_dimension_numbers<[1], [0], [0], [1], [0, 0, 1, 1], [], []>} : vector<16x128xf32>, vector<128x128xf32>, vector<16x128xf32> -> vector<16x128xf32>
    %18 = vector.broadcast %16 : vector<1x128xf32> to vector<16x128xf32>
    %19 = arith.addf %17, %18 : vector<16x128xf32>
    %cst_13 = arith.constant 0.000000e+00 : f32
    %20 = vector.broadcast %cst_13 : f32 to vector<16x128xf32>
    %21 = arith.maximumf %19, %20 : vector<16x128xf32>
    %c384 = arith.constant 384 : index
    %c0_14 = arith.constant 0 : index
    %22 = vector.load %arg1[%c384, %c0_14] : memref<768x128xf32, #tpu.memory_space<vmem>>, vector<128x128xf32>
    %c3 = arith.constant 3 : index
    %c0_15 = arith.constant 0 : index
    %23 = vector.load %arg2[%c3, %c0_15] : memref<8x128xf32, #tpu.memory_space<vmem>>, vector<1x128xf32>
    %cst_16 = arith.constant dense<0.000000e+00> : vector<16x128xf32>
    %24 = tpu.matmul %21, %22, %cst_16 {dimension_numbers = #tpu.dot_dimension_numbers<[1], [0], [0], [1], [0, 0, 1, 1], [], []>} : vector<16x128xf32>, vector<128x128xf32>, vector<16x128xf32> -> vector<16x128xf32>
    %25 = vector.broadcast %23 : vector<1x128xf32> to vector<16x128xf32>
    %26 = arith.addf %24, %25 : vector<16x128xf32>
    %cst_17 = arith.constant 0.000000e+00 : f32
    %27 = vector.broadcast %cst_17 : f32 to vector<16x128xf32>
    %28 = arith.maximumf %26, %27 : vector<16x128xf32>
    %c512 = arith.constant 512 : index
    %c0_18 = arith.constant 0 : index
    %29 = vector.load %arg1[%c512, %c0_18] : memref<768x128xf32, #tpu.memory_space<vmem>>, vector<128x128xf32>
    %c4 = arith.constant 4 : index
    %c0_19 = arith.constant 0 : index
    %30 = vector.load %arg2[%c4, %c0_19] : memref<8x128xf32, #tpu.memory_space<vmem>>, vector<1x128xf32>
    %cst_20 = arith.constant dense<0.000000e+00> : vector<16x128xf32>
    %31 = tpu.matmul %28, %29, %cst_20 {dimension_numbers = #tpu.dot_dimension_numbers<[1], [0], [0], [1], [0, 0, 1, 1], [], []>} : vector<16x128xf32>, vector<128x128xf32>, vector<16x128xf32> -> vector<16x128xf32>
    %32 = vector.broadcast %30 : vector<1x128xf32> to vector<16x128xf32>
    %33 = arith.addf %31, %32 : vector<16x128xf32>
    %cst_21 = arith.constant 0.000000e+00 : f32
    %34 = vector.broadcast %cst_21 : f32 to vector<16x128xf32>
    %35 = arith.maximumf %33, %34 : vector<16x128xf32>
    %c640 = arith.constant 640 : index
    %c0_22 = arith.constant 0 : index
    %36 = vector.load %arg1[%c640, %c0_22] : memref<768x128xf32, #tpu.memory_space<vmem>>, vector<128x128xf32>
    %c5 = arith.constant 5 : index
    %c0_23 = arith.constant 0 : index
    %37 = vector.load %arg2[%c5, %c0_23] : memref<8x128xf32, #tpu.memory_space<vmem>>, vector<1x128xf32>
    %cst_24 = arith.constant dense<0.000000e+00> : vector<16x128xf32>
    %38 = tpu.matmul %35, %36, %cst_24 {dimension_numbers = #tpu.dot_dimension_numbers<[1], [0], [0], [1], [0, 0, 1, 1], [], []>} : vector<16x128xf32>, vector<128x128xf32>, vector<16x128xf32> -> vector<16x128xf32>
    %39 = vector.broadcast %37 : vector<1x128xf32> to vector<16x128xf32>
    %40 = arith.addf %38, %39 : vector<16x128xf32>
    %c0_25 = arith.constant 0 : index
    %c0_26 = arith.constant 0 : index
    %41 = vector.load %arg3[%c0_25, %c0_26] : memref<16x128xf32, #tpu.memory_space<vmem>>, vector<16x128xf32>
    tpu.vector_store %arg3[%c0_25, %c0_26], %40 {strides = array<i32>} : memref<16x128xf32, #tpu.memory_space<vmem>>, vector<16x128xf32>,
    return
  }
}

</mosaic_0001>

<llo_original>
// kernel: tpu_custom_call.1
$region0: #{tpu_custom_call.1}
  #allocation0 [shape = 'u32[]', space=smem, size = 0x4, offset = 0x4, fixed_abs, tag = 'smem constant byte address 0x4 - core index']
  #allocation1 [shape = 'u32[72,128]{1,0:T(1,128)}', space=vmem, size = 0x9000, scoped, tag = 'internal scratch']
  %s0 = inlined_call_operand.hbm [shape: f32[16,128], index: 0, kind: input, shape index: {}]
  %s1 = inlined_call_operand.hbm [shape: f32[768,128], index: 1, kind: input, shape index: {}]
  %s2 = inlined_call_operand.hbm [shape: f32[8,128], index: 2, kind: input, shape index: {}]
  %s3 = inlined_call_operand.hbm [shape: f32[16,128], index: 3, kind: output, shape index: {}]
  %s4 = sld [smem:[#allocation0]]
  $region34: #{tpu_custom_call.1} parent=0
    _
  %s6 = ssub.s32 1, %s4
  %s7 = scalar_select 0, %s6, %s4
  $region1: #{tpu_custom_call.1} parent=0
    #allocation2 [shape = 'u8[8192]{0}', space=vmem, size = 0x2000, scoped, tag = 'input window, operand 0, single buffered']
    #allocation3 [shape = 's32[1]{0}', space=sflag, size = 0x4, scoped, tag = 'scoped memory for tpu_custom_call.1']
    #allocation4 [shape = 's32[1]{0}', space=sflag, size = 0x4, scoped, tag = 'scoped memory for tpu_custom_call.1']
    #allocation5 [shape = 'u8[393216]{0}', space=vmem, size = 0x60000, scoped, tag = 'input window, operand 1, single buffered']
    #allocation6 [shape = 's32[1]{0}', space=sflag, size = 0x4, scoped, tag = 'scoped memory for tpu_custom_call.1']
    #allocation7 [shape = 'u8[4096]{0}', space=vmem, size = 0x1000, scoped, tag = 'input window, operand 2, single buffered']
    #allocation8 [shape = 'u8[8192]{0}', space=vmem, size = 0x2000, scoped, tag = 'output window, operand 0, single buffered']
    %8 = vsyncpa [#allocation3], 0
    %9 = vsyncpa [#allocation6], 0
    %10 = vsyncpa [#allocation4], 0
    // Predicated region
    $region2: #{tpu_custom_call.1} parent=1 // pred_check
      _
    $region3: #{tpu_custom_call.1} parent=1 // pred_check_branch
      %12 = sbr.rel (0) target = $region5
    $region4: #{tpu_custom_call.1} parent=1 // pred_region
      %14 = vsyncadd [#allocation3], 0
      %s15 = sshll.u32 %s0, 4
      %s16 = int_to_ptr.hbm [resolvable:$true] %s15
      %s17 = sshll.u32 [#allocation2], 4
      %s18 = int_to_ptr.vmem [resolvable:$true] %s17
      %23 = dma.hbm_to_vmem [thread:$0]  %s16, 256, %s18, [#allocation3], 128, 128, 8
    $region5: #{tpu_custom_call.1} parent=1 // pred_fallthru
      _
    // Predicated region
    $region6: #{tpu_custom_call.1} parent=1 // pred_check
      _
    $region7: #{tpu_custom_call.1} parent=1 // pred_check_branch
      %25 = sbr.rel (0) target = $region9
    $region8: #{tpu_custom_call.1} parent=1 // pred_region
      %27 = vsyncadd [#allocation6], 0
      %s28 = sshll.u32 %s1, 4
      %s29 = int_to_ptr.hbm [resolvable:$true] %s28
      %s30 = sshll.u32 [#allocation5], 4
      %s31 = int_to_ptr.vmem [resolvable:$true] %s30
      %36 = dma.hbm_to_vmem [thread:$0]  %s29, 12288, %s31, [#allocation6], 128, 128, 8
    $region9: #{tpu_custom_call.1} parent=1 // pred_fallthru
      _
    // Predicated region
    $region10: #{tpu_custom_call.1} parent=1 // pred_check
      _
    $region11: #{tpu_custom_call.1} parent=1 // pred_check_branch
      %38 = sbr.rel (0) target = $region13
    $region12: #{tpu_custom_call.1} parent=1 // pred_region
      %40 = vsyncadd [#allocation6], 0
      %s42 = sshll.u32 %s2, 4
      %s43 = int_to_ptr.hbm [resolvable:$true] %s42
      %s44 = sshll.u32 [#allocation7], 4
      %s45 = int_to_ptr.vmem [resolvable:$true] %s44
      %47 = dma.hbm_to_vmem [thread:$0]  %s43, 128, %s45, [#allocation6]
    $region13: #{tpu_custom_call.1} parent=1 // pred_fallthru
      _
    // Predicated region
    $region14: #{tpu_custom_call.1} parent=1 // pred_check
      _
    $region15: #{tpu_custom_call.1} parent=1 // pred_check_branch
      %49 = sbr.rel (0) target = $region17
    $region16: #{tpu_custom_call.1} parent=1 // pred_region
      %51 = dma.done [#allocation3], 256
    $region17: #{tpu_custom_call.1} parent=1 // pred_fallthru
      _
    // Predicated region
    $region18: #{tpu_custom_call.1} parent=1 // pred_check
      _
    $region19: #{tpu_custom_call.1} parent=1 // pred_check_branch
      %53 = sbr.rel (0) target = $region21
    $region20: #{tpu_custom_call.1} parent=1 // pred_region
      %55 = dma.done [#allocation6], 12288
    $region21: #{tpu_custom_call.1} parent=1 // pred_fallthru
      _
    // Predicated region
    $region22: #{tpu_custom_call.1} parent=1 // pred_check
      _
    $region23: #{tpu_custom_call.1} parent=1 // pred_check_branch
      %57 = sbr.rel (0) target = $region25
    $region24: #{tpu_custom_call.1} parent=1 // pred_region
      %59 = dma.done [#allocation6], 128
    $region25: #{tpu_custom_call.1} parent=1 // pred_fallthru
      _
    %v60 = vld [vmem:[#allocation2] sm:$0xff]
    %v61 = vld [vmem:[#allocation2 + $0x8] sm:$0xff]
    %v62 = vld [vmem:[#allocation5] sm:$0xff]
    %v63 = vld [vmem:[#allocation5 + $0x8] sm:$0xff]
    %v64 = vld [vmem:[#allocation5 + $0x10] sm:$0xff]
    %v65 = vld [vmem:[#allocation5 + $0x18] sm:$0xff]
    %v66 = vld [vmem:[#allocation5 + $0x20] sm:$0xff]
    %v67 = vld [vmem:[#allocation5 + $0x28] sm:$0xff]
    %v68 = vld [vmem:[#allocation5 + $0x30] sm:$0xff]
    %v69 = vld [vmem:[#allocation5 + $0x38] sm:$0xff]
    %v70 = vld [vmem:[#allocation5 + $0x40] sm:$0xff]
    %v71 = vld [vmem:[#allocation5 + $0x48] sm:$0xff]
    %v72 = vld [vmem:[#allocation5 + $0x50] sm:$0xff]
    %v73 = vld [vmem:[#allocation5 + $0x58] sm:$0xff]
    %v74 = vld [vmem:[#allocation5 + $0x60] sm:$0xff]
    %v75 = vld [vmem:[#allocation5 + $0x68] sm:$0xff]
    %v76 = vld [vmem:[#allocation5 + $0x70] sm:$0xff]
    %v77 = vld [vmem:[#allocation5 + $0x78] sm:$0xff]
    %v78 = vld [vmem:[#allocation7] sm:$0x1]
    %v79 = vperm.slane %v78, 0
    %80 = vmatpush.msra.mxu0 %v77
    %81 = vmatpush.msra.mxu0 %v76
    %82 = vmatpush.msra.mxu0 %v75
    %83 = vmatpush.msra.mxu0 %v74
    %84 = vmatpush.msra.mxu0 %v73
    %85 = vmatpush.msra.mxu0 %v72
    %86 = vmatpush.msra.mxu0 %v71
    %87 = vmatpush.msra.mxu0 %v70
    %88 = vmatpush.msra.mxu0 %v69
    %89 = vmatpush.msra.mxu0 %v68
    %90 = vmatpush.msra.mxu0 %v67
    %91 = vmatpush.msra.mxu0 %v66
    %92 = vmatpush.msra.mxu0 %v65
    %93 = vmatpush.msra.mxu0 %v64
    %94 = vmatpush.msra.mxu0 %v63
    %95 = vmatpush.msra.mxu0 %v62
    %96 = vmatmul.f32.gmra.mxu0 %v60
    %v97 = vpop.f32.mrf.mxu0
    %v98 = vadd.f32 %v79, %v97
    %99 = vmatmul.f32.gmra.mxu0 %v61
    %v100 = vpop.f32.mrf.mxu0
    %v101 = vadd.f32 %v79, %v100
    %102 = vdwg.mxu0
    %v103 = vmax.f32 %v98, 0.0
    %v104 = vmax.f32 %v101, 0.0
    %v105 = vld [vmem:[#allocation5 + $0x80] sm:$0xff]
    %v106 = vld [vmem:[#allocation5 + $0x88] sm:$0xff]
    %v107 = vld [vmem:[#allocation5 + $0x90] sm:$0xff]
    %v108 = vld [vmem:[#allocation5 + $0x98] sm:$0xff]
    %v109 = vld [vmem:[#allocation5 + $0xa0] sm:$0xff]
    %v110 = vld [vmem:[#allocation5 + $0xa8] sm:$0xff]
    %v111 = vld [vmem:[#allocation5 + $0xb0] sm:$0xff]
    %v112 = vld [vmem:[#allocation5 + $0xb8] sm:$0xff]
    %v113 = vld [vmem:[#allocation5 + $0xc0] sm:$0xff]
    %v114 = vld [vmem:[#allocation5 + $0xc8] sm:$0xff]
    %v115 = vld [vmem:[#allocation5 + $0xd0] sm:$0xff]
    %v116 = vld [vmem:[#allocation5 + $0xd8] sm:$0xff]
    %v117 = vld [vmem:[#allocation5 + $0xe0] sm:$0xff]
    %v118 = vld [vmem:[#allocation5 + $0xe8] sm:$0xff]
    %v119 = vld [vmem:[#allocation5 + $0xf0] sm:$0xff]
    %v120 = vld [vmem:[#allocation5 + $0xf8] sm:$0xff]
    %v121 = vld [vmem:[#allocation7 + $0x1] sm:$0x1]
    %v122 = vperm.slane %v121, 0
    %123 = vmatpush.msra.mxu0 %v120
    %124 = vmatpush.msra.mxu0 %v119
    %125 = vmatpush.msra.mxu0 %v118
    %126 = vmatpush.msra.mxu0 %v117
    %127 = vmatpush.msra.mxu0 %v116
    %128 = vmatpush.msra.mxu0 %v115
    %129 = vmatpush.msra.mxu0 %v114
    %130 = vmatpush.msra.mxu0 %v113
    %131 = vmatpush.msra.mxu0 %v112
    %132 = vmatpush.msra.mxu0 %v111
    %133 = vmatpush.msra.mxu0 %v110
    %134 = vmatpush.msra.mxu0 %v109
    %135 = vmatpush.msra.mxu0 %v108
    %136 = vmatpush.msra.mxu0 %v107
    %137 = vmatpush.msra.mxu0 %v106
    %138 = vmatpush.msra.mxu0 %v105
    %139 = vmatmul.f32.gmra.mxu0 %v103
    %v140 = vpop.f32.mrf.mxu0
    %v141 = vadd.f32 %v122, %v140
    %142 = vmatmul.f32.gmra.mxu0 %v104
    %v143 = vpop.f32.mrf.mxu0
    %v144 = vadd.f32 %v122, %v143
    %145 = vdwg.mxu0
    %v146 = vmax.f32 %v141, 0.0
    %v147 = vmax.f32 %v144, 0.0
    %v148 = vld [vmem:[#allocation5 + $0x100] sm:$0xff]
    %v149 = vld [vmem:[#allocation5 + $0x108] sm:$0xff]
    %v150 = vld [vmem:[#allocation5 + $0x110] sm:$0xff]
    %v151 = vld [vmem:[#allocation5 + $0x118] sm:$0xff]
    %v152 = vld [vmem:[#allocation5 + $0x120] sm:$0xff]
    %v153 = vld [vmem:[#allocation5 + $0x128] sm:$0xff]
    %v154 = vld [vmem:[#allocation5 + $0x130] sm:$0xff]
    %v155 = vld [vmem:[#allocation5 + $0x138] sm:$0xff]
    %v156 = vld [vmem:[#allocation5 + $0x140] sm:$0xff]
    %v157 = vld [vmem:[#allocation5 + $0x148] sm:$0xff]
    %v158 = vld [vmem:[#allocation5 + $0x150] sm:$0xff]
    %v159 = vld [vmem:[#allocation5 + $0x158] sm:$0xff]
    %v160 = vld [vmem:[#allocation5 + $0x160] sm:$0xff]
    %v161 = vld [vmem:[#allocation5 + $0x168] sm:$0xff]
    %v162 = vld [vmem:[#allocation5 + $0x170] sm:$0xff]
    %v163 = vld [vmem:[#allocation5 + $0x178] sm:$0xff]
    %v164 = vld [vmem:[#allocation7 + $0x2] sm:$0x1]
    %v165 = vperm.slane %v164, 0
    %166 = vmatpush.msra.mxu0 %v163
    %167 = vmatpush.msra.mxu0 %v162
    %168 = vmatpush.msra.mxu0 %v161
    %169 = vmatpush.msra.mxu0 %v160
    %170 = vmatpush.msra.mxu0 %v159
    %171 = vmatpush.msra.mxu0 %v158
    %172 = vmatpush.msra.mxu0 %v157
    %173 = vmatpush.msra.mxu0 %v156
    %174 = vmatpush.msra.mxu0 %v155
    %175 = vmatpush.msra.mxu0 %v154
    %176 = vmatpush.msra.mxu0 %v153
    %177 = vmatpush.msra.mxu0 %v152
    %178 = vmatpush.msra.mxu0 %v151
    %179 = vmatpush.msra.mxu0 %v150
    %180 = vmatpush.msra.mxu0 %v149
    %181 = vmatpush.msra.mxu0 %v148
    %182 = vmatmul.f32.gmra.mxu0 %v146
    %v183 = vpop.f32.mrf.mxu0
    %v184 = vadd.f32 %v165, %v183
    %185 = vmatmul.f32.gmra.mxu0 %v147
    %v186 = vpop.f32.mrf.mxu0
    %v187 = vadd.f32 %v165, %v186
    %188 = vdwg.mxu0
    %v189 = vmax.f32 %v184, 0.0
    %v190 = vmax.f32 %v187, 0.0
    %v191 = vld [vmem:[#allocation5 + $0x180] sm:$0xff]
    %v192 = vld [vmem:[#allocation5 + $0x188] sm:$0xff]
    %v193 = vld [vmem:[#allocation5 + $0x190] sm:$0xff]
    %v194 = vld [vmem:[#allocation5 + $0x198] sm:$0xff]
    %v195 = vld [vmem:[#allocation5 + $0x1a0] sm:$0xff]
    %v196 = vld [vmem:[#allocation5 + $0x1a8] sm:$0xff]
    %v197 = vld [vmem:[#allocation5 + $0x1b0] sm:$0xff]
    %v198 = vld [vmem:[#allocation5 + $0x1b8] sm:$0xff]
    %v199 = vld [vmem:[#allocation5 + $0x1c0] sm:$0xff]
    %v200 = vld [vmem:[#allocation5 + $0x1c8] sm:$0xff]
    %v201 = vld [vmem:[#allocation5 + $0x1d0] sm:$0xff]
    %v202 = vld [vmem:[#allocation5 + $0x1d8] sm:$0xff]
    %v203 = vld [vmem:[#allocation5 + $0x1e0] sm:$0xff]
    %v204 = vld [vmem:[#allocation5 + $0x1e8] sm:$0xff]
    %v205 = vld [vmem:[#allocation5 + $0x1f0] sm:$0xff]
    %v206 = vld [vmem:[#allocation5 + $0x1f8] sm:$0xff]
    %v207 = vld [vmem:[#allocation7 + $0x3] sm:$0x1]
    %v208 = vperm.slane %v207, 0
    %209 = vmatpush.msra.mxu0 %v206
    %210 = vmatpush.msra.mxu0 %v205
    %211 = vmatpush.msra.mxu0 %v204
    %212 = vmatpush.msra.mxu0 %v203
    %213 = vmatpush.msra.mxu0 %v202
    %214 = vmatpush.msra.mxu0 %v201
    %215 = vmatpush.msra.mxu0 %v200
    %216 = vmatpush.msra.mxu0 %v199
    %217 = vmatpush.msra.mxu0 %v198
    %218 = vmatpush.msra.mxu0 %v197
    %219 = vmatpush.msra.mxu0 %v196
    %220 = vmatpush.msra.mxu0 %v195
    %221 = vmatpush.msra.mxu0 %v194
    %222 = vmatpush.msra.mxu0 %v193
    %223 = vmatpush.msra.mxu0 %v192
    %224 = vmatpush.msra.mxu0 %v191
    %225 = vmatmul.f32.gmra.mxu0 %v189
    %v226 = vpop.f32.mrf.mxu0
    %v227 = vadd.f32 %v208, %v226
    %228 = vmatmul.f32.gmra.mxu0 %v190
    %v229 = vpop.f32.mrf.mxu0
    %v230 = vadd.f32 %v208, %v229
    %231 = vdwg.mxu0
    %v232 = vmax.f32 %v227, 0.0
    %v233 = vmax.f32 %v230, 0.0
    %v234 = vld [vmem:[#allocation5 + $0x200] sm:$0xff]
    %v235 = vld [vmem:[#allocation5 + $0x208] sm:$0xff]
    %v236 = vld [vmem:[#allocation5 + $0x210] sm:$0xff]
    %v237 = vld [vmem:[#allocation5 + $0x218] sm:$0xff]
    %v238 = vld [vmem:[#allocation5 + $0x220] sm:$0xff]
    %v239 = vld [vmem:[#allocation5 + $0x228] sm:$0xff]
    %v240 = vld [vmem:[#allocation5 + $0x230] sm:$0xff]
    %v241 = vld [vmem:[#allocation5 + $0x238] sm:$0xff]
    %v242 = vld [vmem:[#allocation5 + $0x240] sm:$0xff]
    %v243 = vld [vmem:[#allocation5 + $0x248] sm:$0xff]
    %v244 = vld [vmem:[#allocation5 + $0x250] sm:$0xff]
    %v245 = vld [vmem:[#allocation5 + $0x258] sm:$0xff]
    %v246 = vld [vmem:[#allocation5 + $0x260] sm:$0xff]
    %v247 = vld [vmem:[#allocation5 + $0x268] sm:$0xff]
    %v248 = vld [vmem:[#allocation5 + $0x270] sm:$0xff]
    %v249 = vld [vmem:[#allocation5 + $0x278] sm:$0xff]
    %v250 = vld [vmem:[#allocation7 + $0x4] sm:$0x1]
    %v251 = vperm.slane %v250, 0
    %252 = vmatpush.msra.mxu0 %v249
    %253 = vmatpush.msra.mxu0 %v248
    %254 = vmatpush.msra.mxu0 %v247
    %255 = vmatpush.msra.mxu0 %v246
    %256 = vmatpush.msra.mxu0 %v245
    %257 = vmatpush.msra.mxu0 %v244
    %258 = vmatpush.msra.mxu0 %v243
    %259 = vmatpush.msra.mxu0 %v242
    %260 = vmatpush.msra.mxu0 %v241
    %261 = vmatpush.msra.mxu0 %v240
    %262 = vmatpush.msra.mxu0 %v239
    %263 = vmatpush.msra.mxu0 %v238
    %264 = vmatpush.msra.mxu0 %v237
    %265 = vmatpush.msra.mxu0 %v236
    %266 = vmatpush.msra.mxu0 %v235
    %267 = vmatpush.msra.mxu0 %v234
    %268 = vmatmul.f32.gmra.mxu0 %v232
    %v269 = vpop.f32.mrf.mxu0
    %v270 = vadd.f32 %v251, %v269
    %271 = vmatmul.f32.gmra.mxu0 %v233
    %v272 = vpop.f32.mrf.mxu0
    %v273 = vadd.f32 %v251, %v272
    %274 = vdwg.mxu0
    %v275 = vmax.f32 %v270, 0.0
    %v276 = vmax.f32 %v273, 0.0
    %v277 = vld [vmem:[#allocation5 + $0x280] sm:$0xff]
    %v278 = vld [vmem:[#allocation5 + $0x288] sm:$0xff]
    %v279 = vld [vmem:[#allocation5 + $0x290] sm:$0xff]
    %v280 = vld [vmem:[#allocation5 + $0x298] sm:$0xff]
    %v281 = vld [vmem:[#allocation5 + $0x2a0] sm:$0xff]
    %v282 = vld [vmem:[#allocation5 + $0x2a8] sm:$0xff]
    %v283 = vld [vmem:[#allocation5 + $0x2b0] sm:$0xff]
    %v284 = vld [vmem:[#allocation5 + $0x2b8] sm:$0xff]
    %v285 = vld [vmem:[#allocation5 + $0x2c0] sm:$0xff]
    %v286 = vld [vmem:[#allocation5 + $0x2c8] sm:$0xff]
    %v287 = vld [vmem:[#allocation5 + $0x2d0] sm:$0xff]
    %v288 = vld [vmem:[#allocation5 + $0x2d8] sm:$0xff]
    %v289 = vld [vmem:[#allocation5 + $0x2e0] sm:$0xff]
    %v290 = vld [vmem:[#allocation5 + $0x2e8] sm:$0xff]
    %v291 = vld [vmem:[#allocation5 + $0x2f0] sm:$0xff]
    %v292 = vld [vmem:[#allocation5 + $0x2f8] sm:$0xff]
    %v293 = vld [vmem:[#allocation7 + $0x5] sm:$0x1]
    %v294 = vperm.slane %v293, 0
    %295 = vmatpush.msra.mxu0 %v292
    %296 = vmatpush.msra.mxu0 %v291
    %297 = vmatpush.msra.mxu0 %v290
    %298 = vmatpush.msra.mxu0 %v289
    %299 = vmatpush.msra.mxu0 %v288
    %300 = vmatpush.msra.mxu0 %v287
    %301 = vmatpush.msra.mxu0 %v286
    %302 = vmatpush.msra.mxu0 %v285
    %303 = vmatpush.msra.mxu0 %v284
    %304 = vmatpush.msra.mxu0 %v283
    %305 = vmatpush.msra.mxu0 %v282
    %306 = vmatpush.msra.mxu0 %v281
    %307 = vmatpush.msra.mxu0 %v280
    %308 = vmatpush.msra.mxu0 %v279
    %309 = vmatpush.msra.mxu0 %v278
    %310 = vmatpush.msra.mxu0 %v277
    %311 = vmatmul.f32.gmra.mxu0 %v275
    %v312 = vpop.f32.mrf.mxu0
    %v313 = vadd.f32 %v294, %v312
    %314 = vmatmul.f32.gmra.mxu0 %v276
    %v315 = vpop.f32.mrf.mxu0
    %v316 = vadd.f32 %v294, %v315
    %317 = vdwg.mxu0
    %318 = vst [vmem:[#allocation8] sm:$0xff] %v313
    %319 = vst [vmem:[#allocation8 + $0x8] sm:$0xff] %v316
    // Predicated region
    $region26: #{tpu_custom_call.1} parent=1 // pred_check
      _
    $region27: #{tpu_custom_call.1} parent=1 // pred_check_branch
      %321 = sbr.rel (0) target = $region29
    $region28: #{tpu_custom_call.1} parent=1 // pred_region
      %323 = vsyncadd [#allocation4], 0
      %s324 = sshll.u32 [#allocation8], 4
      %s325 = int_to_ptr.vmem [resolvable:$true] %s324
      %s326 = sshll.u32 %s3, 4
      %s327 = int_to_ptr.hbm [resolvable:$true] %s326
      %332 = dma.vmem_to_hbm [thread:$0]  %s325, 256, %s327, [#allocation4], 128, 128, 8
    $region29: #{tpu_custom_call.1} parent=1 // pred_fallthru
      _
    // Predicated region
    $region30: #{tpu_custom_call.1} parent=1 // pred_check
      _
    $region31: #{tpu_custom_call.1} parent=1 // pred_check_branch
      %334 = sbr.rel (0) target = $region33
    $region32: #{tpu_custom_call.1} parent=1 // pred_region
      %336 = dma.done [#allocation4], 256
    $region33: #{tpu_custom_call.1} parent=1 // pred_fallthru
      _
    %337 = vsyncpa [#allocation3], 1
    %338 = vsyncpa [#allocation6], 1
    %339 = vsyncpa [#allocation4], 1

</llo_original>
